<compile_context>
chip_gen: v7x
topology: tpu7x:2x2x1
jax: 0.10.0
libtpu: 0.0.40
codegen_flags: <defaults>
</compile_context>

<pallas_src>
import jax
import jax.numpy as jnp
from jax.experimental import pallas as pl
from jax.experimental.pallas import tpu as pltpu


def _self_attention_kernel(x_ref, w1_ref, b1_ref, w2_ref, b2_ref, emat_ref, o_ref):
    # x_ref / o_ref: (Bb, F) lane-dense block, F = S*D (one batch element per row).
    x = x_ref[...]                                                    # (Bb, F)

    # Linear(D, D) + Tanh, applied per sequence position via the block-diagonal
    # (F, F) weight.  MXU matmul with K = N = 256, EUP tanh.
    h = jnp.tanh(
        jnp.dot(x, w1_ref[...], preferred_element_type=jnp.float32)
        + b1_ref[...]                                                 # (1, F) broadcast
    )                                                                 # (Bb, F)

    # Linear(D, 1) per position: block-column (F, S) weight -> per-position scores.
    scores = (
        jnp.dot(h, w2_ref[...], preferred_element_type=jnp.float32)
        + b2_ref[...]                                                 # (1, S) broadcast
    )                                                                 # (Bb, S)

    # Softmax over the sequence axis (PyTorch Softmax(dim=1)), numerically stable.
    # Per-row only, so clipped/garbage rows of a ragged last block cannot leak.
    m = jnp.max(scores, axis=-1, keepdims=True)                       # (Bb, 1)
    e = jnp.exp(scores - m)                                           # (Bb, S)
    denom = jnp.sum(e, axis=-1, keepdims=True)                        # (Bb, 1)
    w = e / denom                                                     # exact divide

    # Expand (Bb, S) weights back to F lanes with a constant 0/1 (S, F) matmul,
    # then scale x.  Output store is a full-lane (Bb, 256) slab -> unmasked vst.
    w_full = jnp.dot(w, emat_ref[...], preferred_element_type=jnp.float32)
    o_ref[...] = (x * w_full).astype(o_ref.dtype)


def self_attention_pallas(x, w1, b1, w2, b2, *, block_b=1024):
    """x: (B, S, D) f32.
    w1: (D, D) pre-transposed vs. torch (y = x @ w1 + b1), b1: (1, D),
    w2: (1, D) (the torch nn.Linear(D, 1) weight row),      b2: (1, 1).
    block_b: batch rows per grid step; must be a multiple of 8 (sublane tiling)."""
    assert block_b % 8 == 0, "block_b must be a multiple of 8"
    B, S, D = x.shape
    F = S * D
    Bb = B if B <= block_b else block_b          # full batch (any B) or a x8 block
    num_blocks = pl.cdiv(B, Bb)                  # ragged last block clipped by Pallas

    # Lane-dense packing (all metadata-only or tiny one-off weight transforms).
    x2 = x.reshape(B, F)                                             # (B, F)
    eye_s = jnp.eye(S, dtype=x.dtype)
    w1_bd = jnp.kron(eye_s, w1)                                      # (F, F) block-diag
    b1_t = jnp.tile(b1, (1, S))                                      # (1, F)
    w2_cols = jnp.kron(eye_s, w2.reshape(D, 1))                      # (F, S) block-col
    b2_row = jnp.tile(b2, (1, S))                                    # (1, S)
    emat = jnp.kron(eye_s, jnp.ones((1, D), dtype=x.dtype))          # (S, F) 0/1 expand

    flops = 2 * B * (F * F + F * S + S * F) + 6 * B * F
    transcendentals = B * (F + S)                                    # tanh + exp
    bytes_accessed = (2 * B * F + F * F + F + F * S + S + S * F) * 4

    out = pl.pallas_call(
        _self_attention_kernel,
        out_shape=jax.ShapeDtypeStruct((B, F), x.dtype),
        grid_spec=pltpu.PrefetchScalarGridSpec(
            num_scalar_prefetch=0,
            grid=(num_blocks,),
            in_specs=[
                pl.BlockSpec((Bb, F), lambda b: (b, 0)),             # x (lane-dense)
                pl.BlockSpec((F, F), lambda b: (0, 0)),              # w1 block-diag
                pl.BlockSpec((1, F), lambda b: (0, 0)),              # b1 tiled
                pl.BlockSpec((F, S), lambda b: (0, 0)),              # w2 block-col
                pl.BlockSpec((1, S), lambda b: (0, 0)),              # b2 row
                pl.BlockSpec((S, F), lambda b: (0, 0)),              # 0/1 expand matrix
            ],
            out_specs=pl.BlockSpec((Bb, F), lambda b: (b, 0)),
        ),
        compiler_params=pltpu.CompilerParams(
            dimension_semantics=("parallel",),    # batch blocks -> megacore split (v7x)
            vmem_limit_bytes=32 << 20,            # ~9 MiB used at Bb=1024; v5e default is 16 MiB
        ),
        cost_estimate=pl.CostEstimate(
            flops=flops,
            transcendentals=transcendentals,
            bytes_accessed=bytes_accessed,
        ),
    )(x2, w1_bd, b1_t, w2_cols, b2_row, emat)
    return out.reshape(B, S, D)


def self_attention_ref(x, w1, b1, w2, b2):
    # Pure-JAX reference (exactly the PyTorch forward semantics).
    h = jnp.tanh(x @ w1 + b1)                                        # (B, S, D)
    scores = h @ w2.reshape(-1, 1) + b2[0, 0]                        # (B, S, 1)
    weights = jax.nn.softmax(scores, axis=1)                         # softmax over seq
    return x * weights


if __name__ == "__main__":
    S, D = 8, 32
    key = jax.random.PRNGKey(0)
    kx, kw1, kb1, kw2, kb2, kx2 = jax.random.split(key, 6)

    # Parameters (shapes from nn.Linear(D, D) and nn.Linear(D, 1)); w1 stored
    # pre-transposed for y = x @ W + b, w2 as the (1, D) torch weight row.
    w1 = jax.random.normal(kw1, (D, D), dtype=jnp.float32) * 0.1
    b1 = jax.random.normal(kb1, (1, D), dtype=jnp.float32) * 0.1
    w2 = jax.random.normal(kw2, (1, D), dtype=jnp.float32) * 0.1
    b2 = jax.random.normal(kb2, (1, 1), dtype=jnp.float32) * 0.1

    # Tolerance note: default-precision MXU matmuls (bf16 passes) differ slightly
    # between the fused in-kernel block-diagonal matmuls and the XLA reference.
    ATOL = RTOL = 1e-2

    # Check 1: single block (B=2 <= block_b -> Bb=B, grid=1).
    x = jax.random.normal(kx, (2, S, D), dtype=jnp.float32)
    out = jax.block_until_ready(self_attention_pallas(x, w1, b1, w2, b2))
    ref = self_attention_ref(x, w1, b1, w2, b2)
    assert out.shape == x.shape
    assert jnp.allclose(out, ref, atol=ATOL, rtol=RTOL), "mismatch vs reference"

    # Check 2: multi-block grid + pad-free ragged last block
    # (B=20, block_b=8 -> 3 blocks, last block clipped from 24 to 20 rows).
    x2 = jax.random.normal(kx2, (20, S, D), dtype=jnp.float32)
    out2 = jax.block_until_ready(self_attention_pallas(x2, w1, b1, w2, b2, block_b=8))
    ref2 = self_attention_ref(x2, w1, b1, w2, b2)
    assert out2.shape == x2.shape
    assert jnp.allclose(out2, ref2, atol=ATOL, rtol=RTOL), "mismatch vs reference (ragged)"

    print("KERNEL_OK")
</pallas_src>

<mosaic_0001>
module attributes {stable_mosaic.version = 11 : i64} {
  func.func @_self_attention_kernel(%arg0: i32, %arg1: memref<2x256xf32, #tpu.memory_space<vmem>>, %arg2: memref<256x256xf32, #tpu.memory_space<vmem>>, %arg3: memref<1x256xf32, #tpu.memory_space<vmem>>, %arg4: memref<256x8xf32, #tpu.memory_space<vmem>>, %arg5: memref<1x8xf32, #tpu.memory_space<vmem>>, %arg6: memref<8x256xf32, #tpu.memory_space<vmem>>, %arg7: memref<2x256xf32, #tpu.memory_space<vmem>>) attributes {dimension_semantics = [#tpu.dimension_semantics<parallel>], iteration_bounds = array<i64: 1>, scalar_prefetch = 0 : i64, scratch_operands = 0 : i64, tpu.core_type = #tpu.core_type<tc>, window_params = [{transform_indices = @transform_0, window_bounds = array<i64: 2, 256>}, {pipeline_mode = #tpu.pipeline_mode<synchronous>, transform_indices = @transform_1, window_bounds = array<i64: 256, 256>}, {pipeline_mode = #tpu.pipeline_mode<synchronous>, transform_indices = @transform_2, window_bounds = array<i64: 1, 256>}, {pipeline_mode = #tpu.pipeline_mode<synchronous>, transform_indices = @transform_3, window_bounds = array<i64: 256, 8>}, {pipeline_mode = #tpu.pipeline_mode<synchronous>, transform_indices = @transform_4, window_bounds = array<i64: 1, 8>}, {pipeline_mode = #tpu.pipeline_mode<synchronous>, transform_indices = @transform_5, window_bounds = array<i64: 8, 256>}, {transform_indices = @transform_6, window_bounds = array<i64: 2, 256>}]} {
    %c0 = arith.constant 0 : index
    %c0_0 = arith.constant 0 : index
    %0 = vector.load %arg1[%c0, %c0_0] : memref<2x256xf32, #tpu.memory_space<vmem>>, vector<2x256xf32>
    %c0_1 = arith.constant 0 : index
    %c0_2 = arith.constant 0 : index
    %1 = vector.load %arg2[%c0_1, %c0_2] : memref<256x256xf32, #tpu.memory_space<vmem>>, vector<256x256xf32>
    %cst = arith.constant dense<0.000000e+00> : vector<2x256xf32>
    %2 = tpu.matmul %0, %1, %cst {dimension_numbers = #tpu.dot_dimension_numbers<[1], [0], [0], [1], [0, 0, 1, 1], [], []>} : vector<2x256xf32>, vector<256x256xf32>, vector<2x256xf32> -> vector<2x256xf32>
    %c0_3 = arith.constant 0 : index
    %c0_4 = arith.constant 0 : index
    %3 = vector.load %arg3[%c0_3, %c0_4] : memref<1x256xf32, #tpu.memory_space<vmem>>, vector<1x256xf32>
    %4 = vector.broadcast %3 : vector<1x256xf32> to vector<2x256xf32>
    %5 = arith.addf %2, %4 : vector<2x256xf32>
    %6 = math.tanh %5 : vector<2x256xf32>
    %c0_5 = arith.constant 0 : index
    %c0_6 = arith.constant 0 : index
    %7 = vector.load %arg4[%c0_5, %c0_6] : memref<256x8xf32, #tpu.memory_space<vmem>>, vector<256x8xf32>
    %cst_7 = arith.constant dense<0.000000e+00> : vector<2x8xf32>
    %8 = tpu.matmul %6, %7, %cst_7 {dimension_numbers = #tpu.dot_dimension_numbers<[1], [0], [0], [1], [0, 0, 1, 1], [], []>} : vector<2x256xf32>, vector<256x8xf32>, vector<2x8xf32> -> vector<2x8xf32>
    %c0_8 = arith.constant 0 : index
    %c0_9 = arith.constant 0 : index
    %9 = vector.load %arg5[%c0_8, %c0_9] : memref<1x8xf32, #tpu.memory_space<vmem>>, vector<1x8xf32>
    %10 = vector.broadcast %9 : vector<1x8xf32> to vector<2x8xf32>
    %11 = arith.addf %8, %10 : vector<2x8xf32>
    %cst_10 = arith.constant dense<0xFF800000> : vector<2xf32>
    %12 = vector.multi_reduction <maximumf>, %11, %cst_10 [1] : vector<2x8xf32> to vector<2xf32>
    %13 = vector.shape_cast %12 : vector<2xf32> to vector<2x1xf32>
    %14 = vector.broadcast %13 : vector<2x1xf32> to vector<2x8xf32>
    %15 = arith.subf %11, %14 : vector<2x8xf32>
    %16 = math.exp %15 : vector<2x8xf32>
    %cst_11 = arith.constant dense<0.000000e+00> : vector<2xf32>
    %17 = vector.multi_reduction <add>, %16, %cst_11 [1] : vector<2x8xf32> to vector<2xf32>
    %18 = vector.shape_cast %17 : vector<2xf32> to vector<2x1xf32>
    %19 = vector.broadcast %18 : vector<2x1xf32> to vector<2x8xf32>
    %20 = arith.divf %16, %19 : vector<2x8xf32>
    %c0_12 = arith.constant 0 : index
    %c0_13 = arith.constant 0 : index
    %21 = vector.load %arg6[%c0_12, %c0_13] : memref<8x256xf32, #tpu.memory_space<vmem>>, vector<8x256xf32>
    %cst_14 = arith.constant dense<0.000000e+00> : vector<2x256xf32>
    %22 = tpu.matmul %20, %21, %cst_14 {dimension_numbers = #tpu.dot_dimension_numbers<[1], [0], [0], [1], [0, 0, 1, 1], [], []>} : vector<2x8xf32>, vector<8x256xf32>, vector<2x256xf32> -> vector<2x256xf32>
    %23 = arith.mulf %0, %22 : vector<2x256xf32>
    %c0_15 = arith.constant 0 : index
    %c0_16 = arith.constant 0 : index
    %24 = vector.load %arg7[%c0_15, %c0_16] : memref<2x256xf32, #tpu.memory_space<vmem>>, vector<2x256xf32>
    tpu.vector_store %arg7[%c0_15, %c0_16], %23 {strides = array<i32>} : memref<2x256xf32, #tpu.memory_space<vmem>>, vector<2x256xf32>,
    return
  }
  func.func @transform_0(%arg0: i32) -> (i32, i32) {
    %c0_i32 = arith.constant 0 : i32
    %c0_i32_0 = arith.constant 0 : i32
    return %arg0, %c0_i32 : i32, i32
  }
  func.func @transform_1(%arg0: i32) -> (i32, i32) {
    %c0_i32 = arith.constant 0 : i32
    %c0_i32_0 = arith.constant 0 : i32
    %c0_i32_1 = arith.constant 0 : i32
    return %c0_i32, %c0_i32_0 : i32, i32
  }
  func.func @transform_2(%arg0: i32) -> (i32, i32) {
    %c0_i32 = arith.constant 0 : i32
    %c0_i32_0 = arith.constant 0 : i32
    %c0_i32_1 = arith.constant 0 : i32
    return %c0_i32, %c0_i32_0 : i32, i32
  }
  func.func @transform_3(%arg0: i32) -> (i32, i32) {
    %c0_i32 = arith.constant 0 : i32
    %c0_i32_0 = arith.constant 0 : i32
    %c0_i32_1 = arith.constant 0 : i32
    return %c0_i32, %c0_i32_0 : i32, i32
  }
  func.func @transform_4(%arg0: i32) -> (i32, i32) {
    %c0_i32 = arith.constant 0 : i32
    %c0_i32_0 = arith.constant 0 : i32
    %c0_i32_1 = arith.constant 0 : i32
    return %c0_i32, %c0_i32_0 : i32, i32
  }
  func.func @transform_5(%arg0: i32) -> (i32, i32) {
    %c0_i32 = arith.constant 0 : i32
    %c0_i32_0 = arith.constant 0 : i32
    %c0_i32_1 = arith.constant 0 : i32
    return %c0_i32, %c0_i32_0 : i32, i32
  }
  func.func @transform_6(%arg0: i32) -> (i32, i32) {
    %c0_i32 = arith.constant 0 : i32
    %c0_i32_0 = arith.constant 0 : i32
    return %arg0, %c0_i32 : i32, i32
  }
}

</mosaic_0001>

<llo_original>
// kernel: tpu_custom_call.1
$region0: #{tpu_custom_call.1}
  #allocation0 [shape = 'u32[]', space=smem, size = 0x4, offset = 0x4, fixed_abs, tag = 'smem constant byte address 0x4 - core index']
  #allocation1 [shape = 'u32[144,128]{1,0:T(1,128)}', space=vmem, size = 0x12000, scoped, tag = 'internal scratch']
  %s0 = inlined_call_operand.vmem [shape: f32[2,256], index: 0, kind: input, shape index: {}]
  %s1 = inlined_call_operand.hbm [shape: f32[256,256], index: 1, kind: input, shape index: {}]
  %s2 = inlined_call_operand.vmem [shape: f32[1,256], index: 2, kind: input, shape index: {}]
  %s3 = inlined_call_operand.vmem [shape: f32[256,8], index: 3, kind: input, shape index: {}]
  %s4 = inlined_call_operand.vmem [shape: f32[1,8], index: 4, kind: input, shape index: {}]
  %s5 = inlined_call_operand.vmem [shape: f32[8,256], index: 5, kind: input, shape index: {}]
  %s6 = inlined_call_operand.hbm [shape: f32[2,256], index: 6, kind: output, shape index: {}]
  %s7 = sld [smem:[#allocation0]]
  $region38: #{tpu_custom_call.1} parent=0
    _
  %s9 = ssub.s32 1, %s7
  %s10 = scalar_select 0, %s9, %s7
  $region1: #{tpu_custom_call.1} parent=0
    #allocation2 [shape = 'u8[262144]{0}', space=vmem, size = 0x40000, scoped, tag = 'input window, operand 1, single buffered']
    #allocation3 [shape = 's32[1]{0}', space=sflag, size = 0x4, scoped, tag = 'scoped memory for tpu_custom_call.1']
    #allocation4 [shape = 's32[1]{0}', space=sflag, size = 0x4, scoped, tag = 'scoped memory for tpu_custom_call.1']
    #allocation5 [shape = 'u8[2048]{0}', space=vmem, size = 0x800, scoped, tag = 'output window, operand 0, single buffered']
    %11 = vsyncpa [#allocation3], 0
    %12 = vsyncpa [#allocation4], 0
    // Predicated region
    $region2: #{tpu_custom_call.1} parent=1 // pred_check
      _
    $region3: #{tpu_custom_call.1} parent=1 // pred_check_branch
      %14 = sbr.rel (0) target = $region5
    $region4: #{tpu_custom_call.1} parent=1 // pred_region
      _
    $region5: #{tpu_custom_call.1} parent=1 // pred_fallthru
      _
    // Predicated region
    $region6: #{tpu_custom_call.1} parent=1 // pred_check
      _
    $region7: #{tpu_custom_call.1} parent=1 // pred_check_branch
      %16 = sbr.rel (0) target = $region9
    $region8: #{tpu_custom_call.1} parent=1 // pred_region
      %s18 = ssub.s32 8192, 8192
      %19 = vsyncadd [#allocation3], %s18
      %s20 = sshll.u32 [#allocation2], 4
      %s21 = int_to_ptr.vmem [resolvable:$true] %s20
      %26 = dma.hbm_to_vmem [thread:$0]  %s1, 8192, %s21, [#allocation3], 256, 256, 16
    $region9: #{tpu_custom_call.1} parent=1 // pred_fallthru
      _
    // Predicated region
    $region10: #{tpu_custom_call.1} parent=1 // pred_check
      _
    $region11: #{tpu_custom_call.1} parent=1 // pred_check_branch
      %28 = sbr.rel (0) target = $region13
    $region12: #{tpu_custom_call.1} parent=1 // pred_region
      _
    $region13: #{tpu_custom_call.1} parent=1 // pred_fallthru
      _
    // Predicated region
    $region14: #{tpu_custom_call.1} parent=1 // pred_check
      _
    $region15: #{tpu_custom_call.1} parent=1 // pred_check_branch
      %30 = sbr.rel (0) target = $region17
    $region16: #{tpu_custom_call.1} parent=1 // pred_region
      _
    $region17: #{tpu_custom_call.1} parent=1 // pred_fallthru
      _
    // Predicated region
    $region18: #{tpu_custom_call.1} parent=1 // pred_check
      _
    $region19: #{tpu_custom_call.1} parent=1 // pred_check_branch
      %32 = sbr.rel (0) target = $region21
    $region20: #{tpu_custom_call.1} parent=1 // pred_region
      _
    $region21: #{tpu_custom_call.1} parent=1 // pred_fallthru
      _
    // Predicated region
    $region22: #{tpu_custom_call.1} parent=1 // pred_check
      _
    $region23: #{tpu_custom_call.1} parent=1 // pred_check_branch
      %34 = sbr.rel (0) target = $region25
    $region24: #{tpu_custom_call.1} parent=1 // pred_region
      _
    $region25: #{tpu_custom_call.1} parent=1 // pred_fallthru
      _
    // Predicated region
    $region26: #{tpu_custom_call.1} parent=1 // pred_check
      _
    $region27: #{tpu_custom_call.1} parent=1 // pred_check_branch
      %36 = sbr.rel (0) target = $region29
    $region28: #{tpu_custom_call.1} parent=1 // pred_region
      %37 = dma.done [#allocation3], 8192
    $region29: #{tpu_custom_call.1} parent=1 // pred_fallthru
      _
    %v38 = vld [vmem:[%s0] sm:$0xf]
    %v39 = vld [vmem:[#allocation2] sm:$0xff]
    %v40 = vld [vmem:[#allocation2 + $0x8] sm:$0xff]
    %v41 = vld [vmem:[#allocation2 + $0x10] sm:$0xff]
    %v42 = vld [vmem:[#allocation2 + $0x18] sm:$0xff]
    %v43 = vld [vmem:[#allocation2 + $0x20] sm:$0xff]
    %v44 = vld [vmem:[#allocation2 + $0x28] sm:$0xff]
    %v45 = vld [vmem:[#allocation2 + $0x30] sm:$0xff]
    %v46 = vld [vmem:[#allocation2 + $0x38] sm:$0xff]
    %v47 = vld [vmem:[#allocation2 + $0x40] sm:$0xff]
    %v48 = vld [vmem:[#allocation2 + $0x48] sm:$0xff]
    %v49 = vld [vmem:[#allocation2 + $0x50] sm:$0xff]
    %v50 = vld [vmem:[#allocation2 + $0x58] sm:$0xff]
    %v51 = vld [vmem:[#allocation2 + $0x60] sm:$0xff]
    %v52 = vld [vmem:[#allocation2 + $0x68] sm:$0xff]
    %v53 = vld [vmem:[#allocation2 + $0x70] sm:$0xff]
    %v54 = vld [vmem:[#allocation2 + $0x78] sm:$0xff]
    %v55 = vld [vmem:[#allocation2 + $0x80] sm:$0xff]
    %v56 = vld [vmem:[#allocation2 + $0x88] sm:$0xff]
    %v57 = vld [vmem:[#allocation2 + $0x90] sm:$0xff]
    %v58 = vld [vmem:[#allocation2 + $0x98] sm:$0xff]
    %v59 = vld [vmem:[#allocation2 + $0xa0] sm:$0xff]
    %v60 = vld [vmem:[#allocation2 + $0xa8] sm:$0xff]
    %v61 = vld [vmem:[#allocation2 + $0xb0] sm:$0xff]
    %v62 = vld [vmem:[#allocation2 + $0xb8] sm:$0xff]
    %v63 = vld [vmem:[#allocation2 + $0xc0] sm:$0xff]
    %v64 = vld [vmem:[#allocation2 + $0xc8] sm:$0xff]
    %v65 = vld [vmem:[#allocation2 + $0xd0] sm:$0xff]
    %v66 = vld [vmem:[#allocation2 + $0xd8] sm:$0xff]
    %v67 = vld [vmem:[#allocation2 + $0xe0] sm:$0xff]
    %v68 = vld [vmem:[#allocation2 + $0xe8] sm:$0xff]
    %v69 = vld [vmem:[#allocation2 + $0xf0] sm:$0xff]
    %v70 = vld [vmem:[#allocation2 + $0xf8] sm:$0xff]
    %v71 = vld [vmem:[#allocation2 + $0x100] sm:$0xff]
    %v72 = vld [vmem:[#allocation2 + $0x108] sm:$0xff]
    %v73 = vld [vmem:[#allocation2 + $0x110] sm:$0xff]
    %v74 = vld [vmem:[#allocation2 + $0x118] sm:$0xff]
    %v75 = vld [vmem:[#allocation2 + $0x120] sm:$0xff]
    %v76 = vld [vmem:[#allocation2 + $0x128] sm:$0xff]
    %v77 = vld [vmem:[#allocation2 + $0x130] sm:$0xff]
    %v78 = vld [vmem:[#allocation2 + $0x138] sm:$0xff]
    %v79 = vld [vmem:[#allocation2 + $0x140] sm:$0xff]
    %v80 = vld [vmem:[#allocation2 + $0x148] sm:$0xff]
    %v81 = vld [vmem:[#allocation2 + $0x150] sm:$0xff]
    %v82 = vld [vmem:[#allocation2 + $0x158] sm:$0xff]
    %v83 = vld [vmem:[#allocation2 + $0x160] sm:$0xff]
    %v84 = vld [vmem:[#allocation2 + $0x168] sm:$0xff]
    %v85 = vld [vmem:[#allocation2 + $0x170] sm:$0xff]
    %v86 = vld [vmem:[#allocation2 + $0x178] sm:$0xff]
    %v87 = vld [vmem:[#allocation2 + $0x180] sm:$0xff]
    %v88 = vld [vmem:[#allocation2 + $0x188] sm:$0xff]
    %v89 = vld [vmem:[#allocation2 + $0x190] sm:$0xff]
    %v90 = vld [vmem:[#allocation2 + $0x198] sm:$0xff]
    %v91 = vld [vmem:[#allocation2 + $0x1a0] sm:$0xff]
    %v92 = vld [vmem:[#allocation2 + $0x1a8] sm:$0xff]
    %v93 = vld [vmem:[#allocation2 + $0x1b0] sm:$0xff]
    %v94 = vld [vmem:[#allocation2 + $0x1b8] sm:$0xff]
    %v95 = vld [vmem:[#allocation2 + $0x1c0] sm:$0xff]
    %v96 = vld [vmem:[#allocation2 + $0x1c8] sm:$0xff]
    %v97 = vld [vmem:[#allocation2 + $0x1d0] sm:$0xff]
    %v98 = vld [vmem:[#allocation2 + $0x1d8] sm:$0xff]
    %v99 = vld [vmem:[#allocation2 + $0x1e0] sm:$0xff]
    %v100 = vld [vmem:[#allocation2 + $0x1e8] sm:$0xff]
    %v101 = vld [vmem:[#allocation2 + $0x1f0] sm:$0xff]
    %v102 = vld [vmem:[#allocation2 + $0x1f8] sm:$0xff]
    %v103 = vld [vmem:[%s2] sm:$0x3]
    %v105 = vlaneseq
    %v106 = vshrl.u32 %v105, 7
    %v107 = vsub.s32 0, %v106
    %v108 = vrot.slane %v103, %v107
    %v109 = vlaneseq
    %v110 = vshrl.u32 %v109, 7
    %v111 = vsub.s32 1, %v110
    %v112 = vrot.slane %v103, %v111
    %v117 = vunpack.c.l.s4 1983009808
    %v118 = vunpack.c.0.s8 %v117
    %v119 = vlaneseq
    %v120 = vshrl.u32 %v119, 7
    %v121 = vsub.s32 %v118, %v120
    %v122 = vrot.slane %v38, %v121
    %v123 = vcombine.high %v122, %v122
    %126 = vmatprep.subr.mxu0 %v40
    %127 = vmatpush1.msra.mxu0 %v39
    %128 = vmatprep.subr.mxu0 %v42
    %129 = vmatpush1.msra.mxu0 %v41
    %130 = vmatprep.subr.mxu0 %v44
    %131 = vmatpush1.msra.mxu0 %v43
    %132 = vmatprep.subr.mxu0 %v46
    %133 = vmatpush1.msra.mxu0 %v45
    %134 = vmatprep.subr.mxu0 %v48
    %135 = vmatpush1.msra.mxu0 %v47
    %136 = vmatprep.subr.mxu0 %v50
    %137 = vmatpush1.msra.mxu0 %v49
    %138 = vmatprep.subr.mxu0 %v52
    %139 = vmatpush1.msra.mxu0 %v51
    %140 = vmatprep.subr.mxu0 %v54
    %141 = vmatpush1.msra.mxu0 %v53
    %142 = vmatprep.subr.mxu0 %v56
    %143 = vmatpush1.msra.mxu0 %v55
    %144 = vmatprep.subr.mxu0 %v58
    %145 = vmatpush1.msra.mxu0 %v57
    %146 = vmatprep.subr.mxu0 %v60
    %147 = vmatpush1.msra.mxu0 %v59
    %148 = vmatprep.subr.mxu0 %v62
    %149 = vmatpush1.msra.mxu0 %v61
    %150 = vmatprep.subr.mxu0 %v64
    %151 = vmatpush1.msra.mxu0 %v63
    %152 = vmatprep.subr.mxu0 %v66
    %153 = vmatpush1.msra.mxu0 %v65
    %154 = vmatprep.subr.mxu0 %v68
    %155 = vmatpush1.msra.mxu0 %v67
    %156 = vmatprep.subr.mxu0 %v70
    %157 = vmatpush1.msra.mxu0 %v69
    %158 = vmatprep.subr.mxu0 %v72
    %159 = vmatpush1.msra.mxu0 %v71
    %160 = vmatprep.subr.mxu0 %v74
    %161 = vmatpush1.msra.mxu0 %v73
    %162 = vmatprep.subr.mxu0 %v76
    %163 = vmatpush1.msra.mxu0 %v75
    %164 = vmatprep.subr.mxu0 %v78
    %165 = vmatpush1.msra.mxu0 %v77
    %166 = vmatprep.subr.mxu0 %v80
    %167 = vmatpush1.msra.mxu0 %v79
    %168 = vmatprep.subr.mxu0 %v82
    %169 = vmatpush1.msra.mxu0 %v81
    %170 = vmatprep.subr.mxu0 %v84
    %171 = vmatpush1.msra.mxu0 %v83
    %172 = vmatprep.subr.mxu0 %v86
    %173 = vmatpush1.msra.mxu0 %v85
    %174 = vmatprep.subr.mxu0 %v88
    %175 = vmatpush1.msra.mxu0 %v87
    %176 = vmatprep.subr.mxu0 %v90
    %177 = vmatpush1.msra.mxu0 %v89
    %178 = vmatprep.subr.mxu0 %v92
    %179 = vmatpush1.msra.mxu0 %v91
    %180 = vmatprep.subr.mxu0 %v94
    %181 = vmatpush1.msra.mxu0 %v93
    %182 = vmatprep.subr.mxu0 %v96
    %183 = vmatpush1.msra.mxu0 %v95
    %184 = vmatprep.subr.mxu0 %v98
    %185 = vmatpush1.msra.mxu0 %v97
    %186 = vmatprep.subr.mxu0 %v100
    %187 = vmatpush1.msra.mxu0 %v99
    %188 = vmatprep.subr.mxu0 %v102
    %189 = vmatpush1.msra.mxu0 %v101
    %190 = vmatprep.mubr.f32.mxu0 %v123
    %191 = vmatmul.mubr.f32.gmra.mrb[0].mxu0 %v122
    %v192 = vpop.f32.mrb[0].mxu0
    %v193 = vadd.f32 %v108, %v192
    %v194 = vpop.f32.mrb[0].mxu0
    %v195 = vadd.f32 %v112, %v194
    %196 = vdwg.mxu0
    %v197 = vtanh.pop %v193
    %v198 = vtanh.pop %v195
    %v199 = vld [vmem:[%s3] sm:$0xff]
    %v200 = vld [vmem:[%s3 + $0x8] sm:$0xff]
    %v201 = vld [vmem:[%s3 + $0x10] sm:$0xff]
    %v202 = vld [vmem:[%s3 + $0x18] sm:$0xff]
    %v203 = vld [vmem:[%s3 + $0x20] sm:$0xff]
    %v204 = vld [vmem:[%s3 + $0x28] sm:$0xff]
    %v205 = vld [vmem:[%s3 + $0x30] sm:$0xff]
    %v206 = vld [vmem:[%s3 + $0x38] sm:$0xff]
    %v207 = vld [vmem:[%s3 + $0x40] sm:$0xff]
    %v208 = vld [vmem:[%s3 + $0x48] sm:$0xff]
    %v209 = vld [vmem:[%s3 + $0x50] sm:$0xff]
    %v210 = vld [vmem:[%s3 + $0x58] sm:$0xff]
    %v211 = vld [vmem:[%s3 + $0x60] sm:$0xff]
    %v212 = vld [vmem:[%s3 + $0x68] sm:$0xff]
    %v213 = vld [vmem:[%s3 + $0x70] sm:$0xff]
    %v214 = vld [vmem:[%s3 + $0x78] sm:$0xff]
    %v215 = vld [vmem:[%s3 + $0x80] sm:$0xff]
    %v216 = vld [vmem:[%s3 + $0x88] sm:$0xff]
    %v217 = vld [vmem:[%s3 + $0x90] sm:$0xff]
    %v218 = vld [vmem:[%s3 + $0x98] sm:$0xff]
    %v219 = vld [vmem:[%s3 + $0xa0] sm:$0xff]
    %v220 = vld [vmem:[%s3 + $0xa8] sm:$0xff]
    %v221 = vld [vmem:[%s3 + $0xb0] sm:$0xff]
    %v222 = vld [vmem:[%s3 + $0xb8] sm:$0xff]
    %v223 = vld [vmem:[%s3 + $0xc0] sm:$0xff]
    %v224 = vld [vmem:[%s3 + $0xc8] sm:$0xff]
    %v225 = vld [vmem:[%s3 + $0xd0] sm:$0xff]
    %v226 = vld [vmem:[%s3 + $0xd8] sm:$0xff]
    %v227 = vld [vmem:[%s3 + $0xe0] sm:$0xff]
    %v228 = vld [vmem:[%s3 + $0xe8] sm:$0xff]
    %v229 = vld [vmem:[%s3 + $0xf0] sm:$0xff]
    %v230 = vld [vmem:[%s3 + $0xf8] sm:$0xff]
    %v231 = vld [vmem:[%s4] sm:$0x1]
    %v233 = vlaneseq
    %v234 = vshrl.u32 %v233, 7
    %v235 = vsub.s32 0, %v234
    %v236 = vrot.slane %v231, %v235
    %238 = vmatprep.subr.mxu0 0.0
    %239 = vmatpush1.msra.mxu0 %v199
    %240 = vmatprep.subr.mxu0 0.0
    %241 = vmatpush1.msra.mxu0 %v200
    %242 = vmatprep.subr.mxu0 0.0
    %243 = vmatpush1.msra.mxu0 %v201
    %244 = vmatprep.subr.mxu0 0.0
    %245 = vmatpush1.msra.mxu0 %v202
    %246 = vmatprep.subr.mxu0 0.0
    %247 = vmatpush1.msra.mxu0 %v203
    %248 = vmatprep.subr.mxu0 0.0
    %249 = vmatpush1.msra.mxu0 %v204
    %250 = vmatprep.subr.mxu0 0.0
    %251 = vmatpush1.msra.mxu0 %v205
    %252 = vmatprep.subr.mxu0 0.0
    %253 = vmatpush1.msra.mxu0 %v206
    %254 = vmatprep.subr.mxu0 0.0
    %255 = vmatpush1.msra.mxu0 %v207
    %256 = vmatprep.subr.mxu0 0.0
    %257 = vmatpush1.msra.mxu0 %v208
    %258 = vmatprep.subr.mxu0 0.0
    %259 = vmatpush1.msra.mxu0 %v209
    %260 = vmatprep.subr.mxu0 0.0
    %261 = vmatpush1.msra.mxu0 %v210
    %262 = vmatprep.subr.mxu0 0.0
    %263 = vmatpush1.msra.mxu0 %v211
    %264 = vmatprep.subr.mxu0 0.0
    %265 = vmatpush1.msra.mxu0 %v212
    %266 = vmatprep.subr.mxu0 0.0
    %267 = vmatpush1.msra.mxu0 %v213
    %268 = vmatprep.subr.mxu0 0.0
    %269 = vmatpush1.msra.mxu0 %v214
    %270 = vmatprep.subr.mxu0 0.0
    %271 = vmatpush1.msra.mxu0 %v215
    %272 = vmatprep.subr.mxu0 0.0
    %273 = vmatpush1.msra.mxu0 %v216
    %274 = vmatprep.subr.mxu0 0.0
    %275 = vmatpush1.msra.mxu0 %v217
    %276 = vmatprep.subr.mxu0 0.0
    %277 = vmatpush1.msra.mxu0 %v218
    %278 = vmatprep.subr.mxu0 0.0
    %279 = vmatpush1.msra.mxu0 %v219
    %280 = vmatprep.subr.mxu0 0.0
    %281 = vmatpush1.msra.mxu0 %v220
    %282 = vmatprep.subr.mxu0 0.0
    %283 = vmatpush1.msra.mxu0 %v221
    %284 = vmatprep.subr.mxu0 0.0
    %285 = vmatpush1.msra.mxu0 %v222
    %286 = vmatprep.subr.mxu0 0.0
    %287 = vmatpush1.msra.mxu0 %v223
    %288 = vmatprep.subr.mxu0 0.0
    %289 = vmatpush1.msra.mxu0 %v224
    %290 = vmatprep.subr.mxu0 0.0
    %291 = vmatpush1.msra.mxu0 %v225
    %292 = vmatprep.subr.mxu0 0.0
    %293 = vmatpush1.msra.mxu0 %v226
    %294 = vmatprep.subr.mxu0 0.0
    %295 = vmatpush1.msra.mxu0 %v227
    %296 = vmatprep.subr.mxu0 0.0
    %297 = vmatpush1.msra.mxu0 %v228
    %298 = vmatprep.subr.mxu0 0.0
    %299 = vmatpush1.msra.mxu0 %v229
    %300 = vmatprep.subr.mxu0 0.0
    %301 = vmatpush1.msra.mxu0 %v230
    %302 = vmatprep.mubr.f32.mxu0 %v198
    %303 = vmatmul.mubr.f32.gmra.mrb[0].mxu0 %v197
    %v304 = vpop.f32.mrb[0].mxu0
    %v305 = vadd.f32 %v236, %v304
    %v306 = vpop.f32.mrb[0].mxu0
    %307 = vdwg.mxu0
    %vm308 = vcmask 58368
    %v309 = vsel %vm308, %v305, -inf
    %310 = vmax.xlane.f32.xlu0 %v309
    %v311 = vpop.xlane.xlu0 %310
    %v312 = vsub.f32 %v305, %v311
    %v313 = vmul.f32 %v312, 1.442695
    %v314 = vpow.pop %v313
    %v315 = vsel %vm308, %v314, 0.0
    %316 = vadd.xlane.f32.xlu0 %v315
    %v317 = vpop.xlane.xlu0 %316
    %v318 = vrcp.pop %v317
    %v319 = vmul.f32 %v314, %v318
    %v320 = vld [vmem:[%s5] sm:$0xff]
    %v321 = vld [vmem:[%s5 + $0x8] sm:$0xff]
    %vm322 = vcmask 64512
    %v324 = vsel %vm322, %v319, 0
    %326 = vmatprep.subr.mxu0 %v321
    %327 = vmatpush1.msra.mxu0 %v320
    %328 = vmatprep.subr.mxu0 0.0
    %329 = vmatpush1.msra.mxu0 0.0
    %330 = vmatprep.subr.mxu0 0.0
    %331 = vmatpush1.msra.mxu0 0.0
    %332 = vmatprep.subr.mxu0 0.0
    %333 = vmatpush1.msra.mxu0 0.0
    %334 = vmatprep.subr.mxu0 0.0
    %335 = vmatpush1.msra.mxu0 0.0
    %336 = vmatprep.subr.mxu0 0.0
    %337 = vmatpush1.msra.mxu0 0.0
    %338 = vmatprep.subr.mxu0 0.0
    %339 = vmatpush1.msra.mxu0 0.0
    %340 = vmatprep.subr.mxu0 0.0
    %341 = vmatpush1.msra.mxu0 0.0
    %342 = vmatprep.subr.mxu0 0.0
    %343 = vmatpush1.msra.mxu0 0.0
    %344 = vmatprep.subr.mxu0 0.0
    %345 = vmatpush1.msra.mxu0 0.0
    %346 = vmatprep.subr.mxu0 0.0
    %347 = vmatpush1.msra.mxu0 0.0
    %348 = vmatprep.subr.mxu0 0.0
    %349 = vmatpush1.msra.mxu0 0.0
    %350 = vmatprep.subr.mxu0 0.0
    %351 = vmatpush1.msra.mxu0 0.0
    %352 = vmatprep.subr.mxu0 0.0
    %353 = vmatpush1.msra.mxu0 0.0
    %354 = vmatprep.subr.mxu0 0.0
    %355 = vmatpush1.msra.mxu0 0.0
    %356 = vmatprep.subr.mxu0 0.0
    %357 = vmatpush1.msra.mxu0 0.0
    %358 = vmatprep.subr.mxu0 0.0
    %359 = vmatpush1.msra.mxu0 0.0
    %360 = vmatprep.subr.mxu0 0.0
    %361 = vmatpush1.msra.mxu0 0.0
    %362 = vmatprep.subr.mxu0 0.0
    %363 = vmatpush1.msra.mxu0 0.0
    %364 = vmatprep.subr.mxu0 0.0
    %365 = vmatpush1.msra.mxu0 0.0
    %366 = vmatprep.subr.mxu0 0.0
    %367 = vmatpush1.msra.mxu0 0.0
    %368 = vmatprep.subr.mxu0 0.0
    %369 = vmatpush1.msra.mxu0 0.0
    %370 = vmatprep.subr.mxu0 0.0
    %371 = vmatpush1.msra.mxu0 0.0
    %372 = vmatprep.subr.mxu0 0.0
    %373 = vmatpush1.msra.mxu0 0.0
    %374 = vmatprep.subr.mxu0 0.0
    %375 = vmatpush1.msra.mxu0 0.0
    %376 = vmatprep.subr.mxu0 0.0
    %377 = vmatpush1.msra.mxu0 0.0
    %378 = vmatprep.subr.mxu0 0.0
    %379 = vmatpush1.msra.mxu0 0.0
    %380 = vmatprep.subr.mxu0 0.0
    %381 = vmatpush1.msra.mxu0 0.0
    %382 = vmatprep.subr.mxu0 0.0
    %383 = vmatpush1.msra.mxu0 0.0
    %384 = vmatprep.subr.mxu0 0.0
    %385 = vmatpush1.msra.mxu0 0.0
    %386 = vmatprep.subr.mxu0 0.0
    %387 = vmatpush1.msra.mxu0 0.0
    %388 = vmatprep.subr.mxu0 0.0
    %389 = vmatpush1.msra.mxu0 0.0
    %390 = vmatprep.mubr.f32.mxu0 0.0
    %391 = vmatmul.mubr.f32.gmra.mrb[0].mxu0 %v324
    %v392 = vpop.f32.mrb[0].mxu0
    %v393 = vadd.f32 0.0, %v392
    %v394 = vpop.f32.mrb[0].mxu0
    %v395 = vadd.f32 0.0, %v394
    %396 = vdwg.mxu0
    %v399 = vcombine.low %v393, %v395
    %v401 = vunpack.c.l.s4 1983009808
    %v402 = vunpack.c.0.s8 %v401
    %v403 = vlaneseq
    %v404 = vshrl.u32 %v403, 7
    %v405 = vsub.s32 %v402, %v404
    %v406 = vrot.slane %v399, %v405
    %v408 = vmul.f32 %v38, %v406
    %409 = vst [vmem:[#allocation5] sm:$0xf] %v408
    // Predicated region
    $region30: #{tpu_custom_call.1} parent=1 // pred_check
      _
    $region31: #{tpu_custom_call.1} parent=1 // pred_check_branch
      %411 = sbr.rel (0) target = $region33
    $region32: #{tpu_custom_call.1} parent=1 // pred_region
      %s413 = ssub.s32 64, 64
      %414 = vsyncadd [#allocation4], %s413
      %s416 = sshll.u32 [#allocation5], 4
      %s417 = int_to_ptr.vmem [resolvable:$true] %s416
      %419 = dma.vmem_to_hbm [thread:$0]  %s417, 64, %s6, [#allocation4]
    $region33: #{tpu_custom_call.1} parent=1 // pred_fallthru
      _
    // Predicated region
    $region34: #{tpu_custom_call.1} parent=1 // pred_check
      _
    $region35: #{tpu_custom_call.1} parent=1 // pred_check_branch
      %421 = sbr.rel (0) target = $region37
    $region36: #{tpu_custom_call.1} parent=1 // pred_region
      %422 = dma.done [#allocation4], 64
    $region37: #{tpu_custom_call.1} parent=1 // pred_fallthru
      _
    %423 = vsyncpa [#allocation3], 1
    %424 = vsyncpa [#allocation4], 1

</llo_original>
